<compile_context>
chip_gen: v5e
topology: v5e:2x2
jax: 0.10.0
libtpu: 0.0.40
codegen_flags: <defaults>
</compile_context>

<pallas_src>
import functools

import numpy as np
import jax
import jax.numpy as jnp
from jax.experimental import pallas as pl
from jax.experimental.pallas import tpu as pltpu

_LANE = 128   # lane alignment for the fused table dims
_SUB = 16     # sublane alignment safe for both f32 and packed bf16 blocks


def _round_up(x, m):
    return ((x + m - 1) // m) * m


def _cat_embedding_kernel(offs_ref, idx_ref, tbl_ref, o_ref):
    """One batch tile.

    offs_ref : (F,)              int32 per-field row offsets (SMEM, scalar-prefetched)
    idx_ref  : (tile_b, F)       int32 raw category codes
    tbl_ref  : (Ktot, fe_pad)    block-diagonal fused embedding table (bf16 / f32)
    o_ref    : (tile_b, fe_pad)  concatenated per-field embeddings per row
    """
    idx = idx_ref[...]                        # (tile_b, F) int32
    tbl = tbl_ref[...]                        # (Ktot, fe_pad)
    tile_b, num_fields = idx.shape
    ktot = tbl.shape[0]

    # Multi-hot over the fused category axis: row b gets a 1 at offs[f]+idx[b,f]
    # for every field (fields own disjoint row ranges of the fused table).
    # NOTE: like nn.Embedding, out-of-range codes are undefined behaviour here
    # (they silently select another field's rows or the zero padding).
    iota_k = jax.lax.broadcasted_iota(jnp.int32, (tile_b, ktot), 1)
    hits = None
    for f in range(num_fields):               # static, small, unrolled
        tgt = idx[:, f:f + 1] + offs_ref[f]   # cheap (tile_b, 1) scalar add
        sel = tgt == iota_k                   # (tile_b, Ktot) bool
        hits = sel if hits is None else jnp.logical_or(hits, sel)
    multihot = hits.astype(tbl.dtype)         # 0/1 in the table dtype (bf16 default)

    # One lane-dense MXU matmul gathers all F embeddings of each row at once;
    # f32 accumulation keeps the 0/1 gather exact.
    out = jnp.dot(multihot, tbl, preferred_element_type=jnp.float32)
    o_ref[...] = out.astype(o_ref.dtype)


def build_fused_table(emb_tables, dtype=jnp.bfloat16):
    """Fuse per-field tables into one block-diagonal, 128-aligned table.

    Returns (fused_table (Ktot_pad, fe_pad), offsets (F,) int32) where field f
    occupies rows [off_f, off_f + cat_dims[f]) and cols [f*emb, (f+1)*emb).
    """
    num_fields = len(emb_tables)
    emb_size = int(emb_tables[0].shape[1])
    cat_dims = [int(t.shape[0]) for t in emb_tables]
    ktot_pad = _round_up(max(sum(cat_dims), _LANE), _LANE)   # MXU-clean contraction dim
    fe_pad = _round_up(num_fields * emb_size, _LANE)         # lane-dense output dim
    fused = np.zeros((ktot_pad, fe_pad), dtype=np.float32)
    offsets = np.zeros((num_fields,), dtype=np.int32)
    off = 0
    for f, t in enumerate(emb_tables):
        c = cat_dims[f]
        fused[off:off + c, f * emb_size:(f + 1) * emb_size] = np.asarray(t, np.float32)
        offsets[f] = off
        off += c
    return jnp.asarray(fused, dtype=dtype), jnp.asarray(offsets)


def _pick_tile_b(batch, num_fields, ktot_pad, fe_pad, tbl_bytes, out_bytes, requested):
    """Largest 16-aligned batch tile that fits an explicit VMEM footprint model.

    Per-row bytes: idx + output double buffers, (tile_b, Ktot) multi-hot
    temporaries (~8 B per (row, category) element) and the f32 accumulator;
    plus the resident (double-buffered) fused table.  A 40 MiB budget keeps the
    kernel safe under v7x's 64 MiB physical VMEM as well as v5e/v6e.
    """
    per_row = (2 * num_fields * 4          # idx double buffer (int32)
               + 2 * fe_pad * out_bytes    # output double buffer
               + 8 * ktot_pad              # iota/bool/multi-hot temporaries
               + 4 * fe_pad)               # f32 matmul accumulator
    table_bytes = 2 * ktot_pad * fe_pad * tbl_bytes
    budget = 40 * 1024 * 1024
    cap = max(_SUB, ((budget - table_bytes) // per_row) // _SUB * _SUB)
    tile_b = max(_SUB, min(requested, cap, _round_up(batch, _SUB)) // _SUB * _SUB)
    # v7x has 2 TensorCores: keep >= 2 grid steps on the ("parallel",) axis when
    # the batch is large enough that splitting keeps tiles a useful size.
    if batch >= 1024 and pl.cdiv(batch, tile_b) < 2:
        tile_b = _round_up(pl.cdiv(batch, 2), _SUB)
    return tile_b


@functools.partial(
    jax.jit,
    static_argnames=("embedding_size", "tile_b", "flatten_output", "out_dtype"))
def basic_cat_embedding(x_cat, fused_table, offsets, *, embedding_size,
                        tile_b=2048, flatten_output=False, out_dtype=None):
    """x_cat: (batch, num_fields) int codes; fused_table/offsets from build_fused_table."""
    batch, num_fields = x_cat.shape
    ktot_pad, fe_pad = fused_table.shape
    fe = num_fields * embedding_size
    assert fe_pad >= fe and fe_pad % _LANE == 0 and ktot_pad % _LANE == 0
    if out_dtype is None:
        out_dtype = fused_table.dtype          # bf16 table -> bf16 writeback

    idx = x_cat.astype(jnp.int32)              # no-op when already int32
    offsets = offsets.astype(jnp.int32)

    tbl_bytes = jnp.dtype(fused_table.dtype).itemsize
    out_bytes = jnp.dtype(out_dtype).itemsize
    tile_b = _pick_tile_b(batch, num_fields, ktot_pad, fe_pad,
                          tbl_bytes, out_bytes, tile_b)
    num_tiles = pl.cdiv(batch, tile_b)
    batch_pad = num_tiles * tile_b
    if batch_pad != batch:
        # Padded rows use code 0 (always valid) and are sliced off below.
        idx = jnp.pad(idx, ((0, batch_pad - batch), (0, 0)))

    per_row = 2 * num_fields * 4 + 2 * fe_pad * out_bytes + 8 * ktot_pad + 4 * fe_pad
    vmem_est = 2 * ktot_pad * fe_pad * tbl_bytes + tile_b * per_row
    vmem_limit = int(min(64 << 20, max(32 << 20, 2 * vmem_est)))

    out = pl.pallas_call(
        _cat_embedding_kernel,
        out_shape=jax.ShapeDtypeStruct((batch_pad, fe_pad), out_dtype),
        grid_spec=pltpu.PrefetchScalarGridSpec(
            num_scalar_prefetch=1,                                        # offsets -> SMEM
            grid=(num_tiles,),
            in_specs=[
                pl.BlockSpec((tile_b, num_fields), lambda i, offs: (i, 0)),  # codes
                pl.BlockSpec((ktot_pad, fe_pad), lambda i, offs: (0, 0)),    # resident table
            ],
            out_specs=pl.BlockSpec((tile_b, fe_pad), lambda i, offs: (i, 0)),
        ),
        compiler_params=pltpu.CompilerParams(
            dimension_semantics=("parallel",),
            vmem_limit_bytes=vmem_limit),
    )(offsets, idx, fused_table)

    out = out[:batch, :fe]                     # drop batch + lane padding
    if flatten_output:
        return out                             # (batch, num_fields*emb)
    return out.reshape(batch, num_fields, embedding_size)


def _reference(x_cat, emb_tables, flatten_output=False):
    """Pure-JAX reference mirroring the PyTorch forward."""
    outs = [tbl[x_cat[:, f]] for f, tbl in enumerate(emb_tables)]
    out = jnp.stack(outs, axis=1)              # (batch, F, emb)
    if flatten_output:
        out = out.reshape(out.shape[0], -1)
    return out


if __name__ == "__main__":
    # 8 categorical fields, embedding_size=16 -> F*emb = 128 (already lane-dense;
    # arbitrary F/emb also work via the fe_pad column padding).
    cat_dims = [7, 11, 5, 13, 9, 6, 8, 12]
    num_fields = len(cat_dims)
    embedding_size = 16
    batch = 32

    key = jax.random.PRNGKey(0)
    k_idx, k_emb = jax.random.split(key)
    idx_keys = jax.random.split(k_idx, num_fields)
    emb_keys = jax.random.split(k_emb, num_fields)

    # Integer category codes, one column per field.
    x_cat = jnp.stack(
        [jax.random.randint(idx_keys[f], (batch,), 0, cat_dims[f], dtype=jnp.int32)
         for f in range(num_fields)], axis=1)

    # Per-field embedding tables, Xavier-uniform as in the PyTorch module.
    emb_tables = []
    for f, c in enumerate(cat_dims):
        bound = float(np.sqrt(6.0 / (c + embedding_size)))
        emb_tables.append(jax.random.uniform(
            emb_keys[f], (c, embedding_size), minval=-bound, maxval=bound,
            dtype=jnp.float32))

    # --- default bf16 path: bf16 table, bf16 writeback, f32 accumulation -------
    fused_bf16, offsets = build_fused_table(emb_tables, dtype=jnp.bfloat16)
    out = jax.block_until_ready(
        basic_cat_embedding(x_cat, fused_bf16, offsets,
                            embedding_size=embedding_size, flatten_output=False))
    # The 0/1 multi-hot gather is exact: result equals the bf16-rounded weights.
    ref_bf16 = _reference(x_cat, [t.astype(jnp.bfloat16) for t in emb_tables])
    assert out.shape == (batch, num_fields, embedding_size), out.shape
    assert out.dtype == jnp.bfloat16, out.dtype
    assert jnp.allclose(out.astype(jnp.float32), ref_bf16.astype(jnp.float32),
                        atol=1e-6, rtol=1e-6), \
        float(jnp.max(jnp.abs(out.astype(jnp.float32) - ref_bf16.astype(jnp.float32))))

    # flatten_output=True path (module option).
    out_flat = jax.block_until_ready(
        basic_cat_embedding(x_cat, fused_bf16, offsets,
                            embedding_size=embedding_size, flatten_output=True))
    assert out_flat.shape == (batch, num_fields * embedding_size)
    assert jnp.allclose(out_flat.astype(jnp.float32),
                        ref_bf16.reshape(batch, -1).astype(jnp.float32),
                        atol=1e-6, rtol=1e-6)

    # --- full-precision option: f32 table + f32 writeback matches f32 reference --
    fused_f32, offsets_f32 = build_fused_table(emb_tables, dtype=jnp.float32)
    out_f32 = jax.block_until_ready(
        basic_cat_embedding(x_cat, fused_f32, offsets_f32,
                            embedding_size=embedding_size))
    ref_f32 = _reference(x_cat, emb_tables)
    assert out_f32.dtype == jnp.float32
    assert jnp.allclose(out_f32, ref_f32, atol=1e-6, rtol=1e-6), \
        float(jnp.max(jnp.abs(out_f32 - ref_f32)))

    print("KERNEL_OK")
</pallas_src>

<mosaic_0001>
module attributes {stable_mosaic.version = 11 : i64} {
  func.func @_cat_embedding_kernel(%arg0: i32, %arg1: memref<8xi32, #tpu.memory_space<smem>>, %arg2: memref<32x8xi32, #tpu.memory_space<vmem>>, %arg3: memref<128x128xbf16, #tpu.memory_space<vmem>>, %arg4: memref<32x128xbf16, #tpu.memory_space<vmem>>) attributes {dimension_semantics = [#tpu.dimension_semantics<parallel>], iteration_bounds = array<i64: 1>, scalar_prefetch = 1 : i64, scratch_operands = 0 : i64, tpu.core_type = #tpu.core_type<tc>, window_params = [{transform_indices = @transform_0, window_bounds = array<i64: 32, 8>}, {pipeline_mode = #tpu.pipeline_mode<synchronous>, transform_indices = @transform_1, window_bounds = array<i64: 128, 128>}, {transform_indices = @transform_2, window_bounds = array<i64: 32, 128>}]} {
    %c0 = arith.constant 0 : index
    %c0_0 = arith.constant 0 : index
    %0 = vector.load %arg2[%c0, %c0_0] : memref<32x8xi32, #tpu.memory_space<vmem>>, vector<32x8xi32>
    %c0_1 = arith.constant 0 : index
    %c0_2 = arith.constant 0 : index
    %1 = vector.load %arg3[%c0_1, %c0_2] : memref<128x128xbf16, #tpu.memory_space<vmem>>, vector<128x128xbf16>
    %2 = tpu.iota {dimensions = array<i32: 1>} : vector<32x128xi32>
    %3 = vector.extract_strided_slice %0 {offsets = [0, 0], sizes = [32, 1], strides = [1, 1]} : vector<32x8xi32> to vector<32x1xi32>
    %c0_3 = arith.constant 0 : index
    %4 = memref.load %arg1[%c0_3] : memref<8xi32, #tpu.memory_space<smem>>
    %5 = vector.broadcast %4 : i32 to vector<32x1xi32>
    %6 = arith.addi %3, %5 : vector<32x1xi32>
    %7 = vector.broadcast %6 : vector<32x1xi32> to vector<32x128xi32>
    %8 = arith.cmpi eq, %7, %2 : vector<32x128xi32>
    %9 = vector.extract_strided_slice %0 {offsets = [0, 1], sizes = [32, 1], strides = [1, 1]} : vector<32x8xi32> to vector<32x1xi32>
    %c1 = arith.constant 1 : index
    %10 = memref.load %arg1[%c1] : memref<8xi32, #tpu.memory_space<smem>>
    %11 = vector.broadcast %10 : i32 to vector<32x1xi32>
    %12 = arith.addi %9, %11 : vector<32x1xi32>
    %13 = vector.broadcast %12 : vector<32x1xi32> to vector<32x128xi32>
    %14 = arith.cmpi eq, %13, %2 : vector<32x128xi32>
    %15 = arith.ori %8, %14 : vector<32x128xi1>
    %16 = vector.extract_strided_slice %0 {offsets = [0, 2], sizes = [32, 1], strides = [1, 1]} : vector<32x8xi32> to vector<32x1xi32>
    %c2 = arith.constant 2 : index
    %17 = memref.load %arg1[%c2] : memref<8xi32, #tpu.memory_space<smem>>
    %18 = vector.broadcast %17 : i32 to vector<32x1xi32>
    %19 = arith.addi %16, %18 : vector<32x1xi32>
    %20 = vector.broadcast %19 : vector<32x1xi32> to vector<32x128xi32>
    %21 = arith.cmpi eq, %20, %2 : vector<32x128xi32>
    %22 = arith.ori %15, %21 : vector<32x128xi1>
    %23 = vector.extract_strided_slice %0 {offsets = [0, 3], sizes = [32, 1], strides = [1, 1]} : vector<32x8xi32> to vector<32x1xi32>
    %c3 = arith.constant 3 : index
    %24 = memref.load %arg1[%c3] : memref<8xi32, #tpu.memory_space<smem>>
    %25 = vector.broadcast %24 : i32 to vector<32x1xi32>
    %26 = arith.addi %23, %25 : vector<32x1xi32>
    %27 = vector.broadcast %26 : vector<32x1xi32> to vector<32x128xi32>
    %28 = arith.cmpi eq, %27, %2 : vector<32x128xi32>
    %29 = arith.ori %22, %28 : vector<32x128xi1>
    %30 = vector.extract_strided_slice %0 {offsets = [0, 4], sizes = [32, 1], strides = [1, 1]} : vector<32x8xi32> to vector<32x1xi32>
    %c4 = arith.constant 4 : index
    %31 = memref.load %arg1[%c4] : memref<8xi32, #tpu.memory_space<smem>>
    %32 = vector.broadcast %31 : i32 to vector<32x1xi32>
    %33 = arith.addi %30, %32 : vector<32x1xi32>
    %34 = vector.broadcast %33 : vector<32x1xi32> to vector<32x128xi32>
    %35 = arith.cmpi eq, %34, %2 : vector<32x128xi32>
    %36 = arith.ori %29, %35 : vector<32x128xi1>
    %37 = vector.extract_strided_slice %0 {offsets = [0, 5], sizes = [32, 1], strides = [1, 1]} : vector<32x8xi32> to vector<32x1xi32>
    %c5 = arith.constant 5 : index
    %38 = memref.load %arg1[%c5] : memref<8xi32, #tpu.memory_space<smem>>
    %39 = vector.broadcast %38 : i32 to vector<32x1xi32>
    %40 = arith.addi %37, %39 : vector<32x1xi32>
    %41 = vector.broadcast %40 : vector<32x1xi32> to vector<32x128xi32>
    %42 = arith.cmpi eq, %41, %2 : vector<32x128xi32>
    %43 = arith.ori %36, %42 : vector<32x128xi1>
    %44 = vector.extract_strided_slice %0 {offsets = [0, 6], sizes = [32, 1], strides = [1, 1]} : vector<32x8xi32> to vector<32x1xi32>
    %c6 = arith.constant 6 : index
    %45 = memref.load %arg1[%c6] : memref<8xi32, #tpu.memory_space<smem>>
    %46 = vector.broadcast %45 : i32 to vector<32x1xi32>
    %47 = arith.addi %44, %46 : vector<32x1xi32>
    %48 = vector.broadcast %47 : vector<32x1xi32> to vector<32x128xi32>
    %49 = arith.cmpi eq, %48, %2 : vector<32x128xi32>
    %50 = arith.ori %43, %49 : vector<32x128xi1>
    %51 = vector.extract_strided_slice %0 {offsets = [0, 7], sizes = [32, 1], strides = [1, 1]} : vector<32x8xi32> to vector<32x1xi32>
    %c7 = arith.constant 7 : index
    %52 = memref.load %arg1[%c7] : memref<8xi32, #tpu.memory_space<smem>>
    %53 = vector.broadcast %52 : i32 to vector<32x1xi32>
    %54 = arith.addi %51, %53 : vector<32x1xi32>
    %55 = vector.broadcast %54 : vector<32x1xi32> to vector<32x128xi32>
    %56 = arith.cmpi eq, %55, %2 : vector<32x128xi32>
    %57 = arith.ori %50, %56 : vector<32x128xi1>
    %58 = arith.extui %57 : vector<32x128xi1> to vector<32x128xi32>
    %59 = arith.sitofp %58 : vector<32x128xi32> to vector<32x128xf32>
    %60 = arith.truncf %59 : vector<32x128xf32> to vector<32x128xbf16>
    %cst = arith.constant dense<0.000000e+00> : vector<32x128xf32>
    %61 = tpu.matmul %60, %1, %cst {dimension_numbers = #tpu.dot_dimension_numbers<[1], [0], [0], [1], [0, 0, 1, 1], [], []>} : vector<32x128xbf16>, vector<128x128xbf16>, vector<32x128xf32> -> vector<32x128xf32>
    %62 = arith.truncf %61 : vector<32x128xf32> to vector<32x128xbf16>
    %c0_4 = arith.constant 0 : index
    %c0_5 = arith.constant 0 : index
    %63 = vector.load %arg4[%c0_4, %c0_5] : memref<32x128xbf16, #tpu.memory_space<vmem>>, vector<32x128xbf16>
    tpu.vector_store %arg4[%c0_4, %c0_5], %62 {strides = array<i32>} : memref<32x128xbf16, #tpu.memory_space<vmem>>, vector<32x128xbf16>,
    return
  }
  func.func @transform_0(%arg0: i32, %arg1: memref<8xi32, #tpu.memory_space<smem>>) -> (i32, i32) {
    %c0_i32 = arith.constant 0 : i32
    %c0_i32_0 = arith.constant 0 : i32
    return %arg0, %c0_i32 : i32, i32
  }
  func.func @transform_1(%arg0: i32, %arg1: memref<8xi32, #tpu.memory_space<smem>>) -> (i32, i32) {
    %c0_i32 = arith.constant 0 : i32
    %c0_i32_0 = arith.constant 0 : i32
    %c0_i32_1 = arith.constant 0 : i32
    return %c0_i32, %c0_i32_0 : i32, i32
  }
  func.func @transform_2(%arg0: i32, %arg1: memref<8xi32, #tpu.memory_space<smem>>) -> (i32, i32) {
    %c0_i32 = arith.constant 0 : i32
    %c0_i32_0 = arith.constant 0 : i32
    return %arg0, %c0_i32 : i32, i32
  }
}

</mosaic_0001>

<llo_original>
// kernel: basic_cat_embedding.1
$region0: #{basic_cat_embedding.1}
  #allocation0 [shape = 'u32[]', space=smem, size = 0x4, offset = 0x4, fixed_abs, tag = 'smem constant byte address 0x4 - core index']
  #allocation1 [shape = 'u32[72,128]{1,0:T(1,128)}', space=vmem, size = 0x9000, scoped, tag = 'internal scratch']
  #allocation2 [shape = 's32[1]{0}', space=sflag, size = 0x4, scoped, tag = 'scoped memory for basic_cat_embedding.1']
  #allocation3 [shape = 'u8[512]{0}', space=smem, size = 0x200, scoped, tag = 'prefetched SMEM operand 0']
  %s0 = inlined_call_operand.vmem [shape: s32[8], index: 0, kind: input, shape index: {}]
  %s1 = inlined_call_operand.vmem [shape: s32[32,8], index: 1, kind: input, shape index: {}]
  %s2 = inlined_call_operand.hbm [shape: bf16[128,128], index: 2, kind: input, shape index: {}]
  %s3 = inlined_call_operand.vmem [shape: bf16[32,128], index: 3, kind: output, shape index: {}]
  %s4 = sld [smem:[#allocation0]]
  $region22: #{basic_cat_embedding.1} parent=0
    _
  %s6 = ssub.s32 1, %s4
  %s7 = scalar_select 0, %s6, %s4
  %s9 = sshll.u32 %s0, 4
  %s10 = int_to_ptr.vmem [resolvable:$true] %s9
  %12 = dma.vmem_to_smem %s10, 16, [#allocation3], [#allocation2]
  %14 = dma.done [#allocation2], 16
  %15 = sfence
  $region1: #{basic_cat_embedding.1} parent=0
    #allocation4 [shape = 'u8[32768]{0}', space=vmem, size = 0x8000, scoped, tag = 'input window, operand 2, single buffered']
    #allocation5 [shape = 's32[1]{0}', space=sflag, size = 0x4, scoped, tag = 'scoped memory for basic_cat_embedding.1']
    %16 = vsyncpa [#allocation5], 0
    // Predicated region
    $region2: #{basic_cat_embedding.1} parent=1 // pred_check
      _
    $region3: #{basic_cat_embedding.1} parent=1 // pred_check_branch
      %18 = sbr.rel (0) target = $region5
    $region4: #{basic_cat_embedding.1} parent=1 // pred_region
      _
    $region5: #{basic_cat_embedding.1} parent=1 // pred_fallthru
      _
    // Predicated region
    $region6: #{basic_cat_embedding.1} parent=1 // pred_check
      _
    $region7: #{basic_cat_embedding.1} parent=1 // pred_check_branch
      %20 = sbr.rel (0) target = $region9
    $region8: #{basic_cat_embedding.1} parent=1 // pred_region
      %22 = vsyncadd [#allocation5], 0
      %s23 = sshll.u32 %s2, 4
      %s24 = int_to_ptr.hbm [resolvable:$true] %s23
      %s25 = sshll.u32 [#allocation4], 4
      %s26 = int_to_ptr.vmem [resolvable:$true] %s25
      %31 = dma.hbm_to_vmem [thread:$0]  %s24, 1024, %s26, [#allocation5], 64, 64, 4
    $region9: #{basic_cat_embedding.1} parent=1 // pred_fallthru
      _
    // Predicated region
    $region10: #{basic_cat_embedding.1} parent=1 // pred_check
      _
    $region11: #{basic_cat_embedding.1} parent=1 // pred_check_branch
      %33 = sbr.rel (0) target = $region13
    $region12: #{basic_cat_embedding.1} parent=1 // pred_region
      %35 = dma.done [#allocation5], 1024
    $region13: #{basic_cat_embedding.1} parent=1 // pred_fallthru
      _
    %v36 = vld [vmem:[%s1] sm:$0xff]
    %v37 = vld [vmem:[%s1 + $0x8] sm:$0xff]
    %v38 = vld [vmem:[%s1 + $0x10] sm:$0xff]
    %v39 = vld [vmem:[%s1 + $0x18] sm:$0xff]
    %v40 = vld [vmem:[#allocation4] sm:$0xf]
    %v41 = vld [vmem:[#allocation4 + $0x4] sm:$0xf]
    %v42 = vld [vmem:[#allocation4 + $0x8] sm:$0xf]
    %v43 = vld [vmem:[#allocation4 + $0xc] sm:$0xf]
    %v44 = vld [vmem:[#allocation4 + $0x10] sm:$0xf]
    %v45 = vld [vmem:[#allocation4 + $0x14] sm:$0xf]
    %v46 = vld [vmem:[#allocation4 + $0x18] sm:$0xf]
    %v47 = vld [vmem:[#allocation4 + $0x1c] sm:$0xf]
    %v48 = vld [vmem:[#allocation4 + $0x20] sm:$0xf]
    %v49 = vld [vmem:[#allocation4 + $0x24] sm:$0xf]
    %v50 = vld [vmem:[#allocation4 + $0x28] sm:$0xf]
    %v51 = vld [vmem:[#allocation4 + $0x2c] sm:$0xf]
    %v52 = vld [vmem:[#allocation4 + $0x30] sm:$0xf]
    %v53 = vld [vmem:[#allocation4 + $0x34] sm:$0xf]
    %v54 = vld [vmem:[#allocation4 + $0x38] sm:$0xf]
    %v55 = vld [vmem:[#allocation4 + $0x3c] sm:$0xf]
    %v56 = vlaneseq
    %v57 = vand.u32 %v56, 127
    %s58 = sld [smem:[#allocation3]]
    %v59 = vstv %s58
    %v60 = vadd.s32 %v36, %v59
    %v61 = vadd.s32 %v37, %v59
    %v62 = vadd.s32 %v38, %v59
    %v63 = vadd.s32 %v39, %v59
    %64 = vset.pattern.permute.xlu0 0
    %65 = vperm.xlu0 %64, %v60
    %v66 = vpop.permute.xlu0 %65
    %67 = vset.pattern.permute.xlu0 0
    %68 = vperm.xlu0 %67, %v61
    %v69 = vpop.permute.xlu0 %68
    %70 = vset.pattern.permute.xlu0 0
    %71 = vperm.xlu0 %70, %v62
    %v72 = vpop.permute.xlu0 %71
    %73 = vset.pattern.permute.xlu0 0
    %74 = vperm.xlu0 %73, %v63
    %v75 = vpop.permute.xlu0 %74
    %vm76 = vcmp.eq.s32.totalorder %v66, %v57
    %vm77 = vcmp.eq.s32.totalorder %v69, %v57
    %vm78 = vcmp.eq.s32.totalorder %v72, %v57
    %vm79 = vcmp.eq.s32.totalorder %v75, %v57
    %s80 = sld [smem:[#allocation3 + $0x1]]
    %v81 = vstv %s80
    %v82 = vadd.s32 %v36, %v81
    %v83 = vadd.s32 %v37, %v81
    %v84 = vadd.s32 %v38, %v81
    %v85 = vadd.s32 %v39, %v81
    %86 = vset.pattern.permute.xlu0 1
    %87 = vperm.xlu0 %86, %v82
    %v88 = vpop.permute.xlu0 %87
    %89 = vset.pattern.permute.xlu0 1
    %90 = vperm.xlu0 %89, %v83
    %v91 = vpop.permute.xlu0 %90
    %92 = vset.pattern.permute.xlu0 1
    %93 = vperm.xlu0 %92, %v84
    %v94 = vpop.permute.xlu0 %93
    %95 = vset.pattern.permute.xlu0 1
    %96 = vperm.xlu0 %95, %v85
    %v97 = vpop.permute.xlu0 %96
    %vm98 = vcmp.eq.s32.totalorder %v88, %v57
    %vm99 = vcmp.eq.s32.totalorder %v91, %v57
    %vm100 = vcmp.eq.s32.totalorder %v94, %v57
    %vm101 = vcmp.eq.s32.totalorder %v97, %v57
    %vm102 = vmor %vm76, %vm98
    %vm103 = vmor %vm77, %vm99
    %vm104 = vmor %vm78, %vm100
    %vm105 = vmor %vm79, %vm101
    %s106 = sld [smem:[#allocation3 + $0x2]]
    %v107 = vstv %s106
    %v108 = vadd.s32 %v36, %v107
    %v109 = vadd.s32 %v37, %v107
    %v110 = vadd.s32 %v38, %v107
    %v111 = vadd.s32 %v39, %v107
    %112 = vset.pattern.permute.xlu0 2
    %113 = vperm.xlu0 %112, %v108
    %v114 = vpop.permute.xlu0 %113
    %115 = vset.pattern.permute.xlu0 2
    %116 = vperm.xlu0 %115, %v109
    %v117 = vpop.permute.xlu0 %116
    %118 = vset.pattern.permute.xlu0 2
    %119 = vperm.xlu0 %118, %v110
    %v120 = vpop.permute.xlu0 %119
    %121 = vset.pattern.permute.xlu0 2
    %122 = vperm.xlu0 %121, %v111
    %v123 = vpop.permute.xlu0 %122
    %vm124 = vcmp.eq.s32.totalorder %v114, %v57
    %vm125 = vcmp.eq.s32.totalorder %v117, %v57
    %vm126 = vcmp.eq.s32.totalorder %v120, %v57
    %vm127 = vcmp.eq.s32.totalorder %v123, %v57
    %vm128 = vmor %vm102, %vm124
    %vm129 = vmor %vm103, %vm125
    %vm130 = vmor %vm104, %vm126
    %vm131 = vmor %vm105, %vm127
    %s132 = sld [smem:[#allocation3 + $0x3]]
    %v133 = vstv %s132
    %v134 = vadd.s32 %v36, %v133
    %v135 = vadd.s32 %v37, %v133
    %v136 = vadd.s32 %v38, %v133
    %v137 = vadd.s32 %v39, %v133
    %138 = vset.pattern.permute.xlu0 3
    %139 = vperm.xlu0 %138, %v134
    %v140 = vpop.permute.xlu0 %139
    %141 = vset.pattern.permute.xlu0 3
    %142 = vperm.xlu0 %141, %v135
    %v143 = vpop.permute.xlu0 %142
    %144 = vset.pattern.permute.xlu0 3
    %145 = vperm.xlu0 %144, %v136
    %v146 = vpop.permute.xlu0 %145
    %147 = vset.pattern.permute.xlu0 3
    %148 = vperm.xlu0 %147, %v137
    %v149 = vpop.permute.xlu0 %148
    %vm150 = vcmp.eq.s32.totalorder %v140, %v57
    %vm151 = vcmp.eq.s32.totalorder %v143, %v57
    %vm152 = vcmp.eq.s32.totalorder %v146, %v57
    %vm153 = vcmp.eq.s32.totalorder %v149, %v57
    %vm154 = vmor %vm128, %vm150
    %vm155 = vmor %vm129, %vm151
    %vm156 = vmor %vm130, %vm152
    %vm157 = vmor %vm131, %vm153
    %s158 = sld [smem:[#allocation3 + $0x4]]
    %v159 = vstv %s158
    %v160 = vadd.s32 %v36, %v159
    %v161 = vadd.s32 %v37, %v159
    %v162 = vadd.s32 %v38, %v159
    %v163 = vadd.s32 %v39, %v159
    %164 = vset.pattern.permute.xlu0 4
    %165 = vperm.xlu0 %164, %v160
    %v166 = vpop.permute.xlu0 %165
    %167 = vset.pattern.permute.xlu0 4
    %168 = vperm.xlu0 %167, %v161
    %v169 = vpop.permute.xlu0 %168
    %170 = vset.pattern.permute.xlu0 4
    %171 = vperm.xlu0 %170, %v162
    %v172 = vpop.permute.xlu0 %171
    %173 = vset.pattern.permute.xlu0 4
    %174 = vperm.xlu0 %173, %v163
    %v175 = vpop.permute.xlu0 %174
    %vm176 = vcmp.eq.s32.totalorder %v166, %v57
    %vm177 = vcmp.eq.s32.totalorder %v169, %v57
    %vm178 = vcmp.eq.s32.totalorder %v172, %v57
    %vm179 = vcmp.eq.s32.totalorder %v175, %v57
    %vm180 = vmor %vm154, %vm176
    %vm181 = vmor %vm155, %vm177
    %vm182 = vmor %vm156, %vm178
    %vm183 = vmor %vm157, %vm179
    %s184 = sld [smem:[#allocation3 + $0x5]]
    %v185 = vstv %s184
    %v186 = vadd.s32 %v36, %v185
    %v187 = vadd.s32 %v37, %v185
    %v188 = vadd.s32 %v38, %v185
    %v189 = vadd.s32 %v39, %v185
    %190 = vset.pattern.permute.xlu0 5
    %191 = vperm.xlu0 %190, %v186
    %v192 = vpop.permute.xlu0 %191
    %193 = vset.pattern.permute.xlu0 5
    %194 = vperm.xlu0 %193, %v187
    %v195 = vpop.permute.xlu0 %194
    %196 = vset.pattern.permute.xlu0 5
    %197 = vperm.xlu0 %196, %v188
    %v198 = vpop.permute.xlu0 %197
    %199 = vset.pattern.permute.xlu0 5
    %200 = vperm.xlu0 %199, %v189
    %v201 = vpop.permute.xlu0 %200
    %vm202 = vcmp.eq.s32.totalorder %v192, %v57
    %vm203 = vcmp.eq.s32.totalorder %v195, %v57
    %vm204 = vcmp.eq.s32.totalorder %v198, %v57
    %vm205 = vcmp.eq.s32.totalorder %v201, %v57
    %vm206 = vmor %vm180, %vm202
    %vm207 = vmor %vm181, %vm203
    %vm208 = vmor %vm182, %vm204
    %vm209 = vmor %vm183, %vm205
    %s210 = sld [smem:[#allocation3 + $0x6]]
    %v211 = vstv %s210
    %v212 = vadd.s32 %v36, %v211
    %v213 = vadd.s32 %v37, %v211
    %v214 = vadd.s32 %v38, %v211
    %v215 = vadd.s32 %v39, %v211
    %216 = vset.pattern.permute.xlu0 6
    %217 = vperm.xlu0 %216, %v212
    %v218 = vpop.permute.xlu0 %217
    %219 = vset.pattern.permute.xlu0 6
    %220 = vperm.xlu0 %219, %v213
    %v221 = vpop.permute.xlu0 %220
    %222 = vset.pattern.permute.xlu0 6
    %223 = vperm.xlu0 %222, %v214
    %v224 = vpop.permute.xlu0 %223
    %225 = vset.pattern.permute.xlu0 6
    %226 = vperm.xlu0 %225, %v215
    %v227 = vpop.permute.xlu0 %226
    %vm228 = vcmp.eq.s32.totalorder %v218, %v57
    %vm229 = vcmp.eq.s32.totalorder %v221, %v57
    %vm230 = vcmp.eq.s32.totalorder %v224, %v57
    %vm231 = vcmp.eq.s32.totalorder %v227, %v57
    %vm232 = vmor %vm206, %vm228
    %vm233 = vmor %vm207, %vm229
    %vm234 = vmor %vm208, %vm230
    %vm235 = vmor %vm209, %vm231
    %s236 = sld [smem:[#allocation3 + $0x7]]
    %v237 = vstv %s236
    %v238 = vadd.s32 %v36, %v237
    %v239 = vadd.s32 %v37, %v237
    %v240 = vadd.s32 %v38, %v237
    %v241 = vadd.s32 %v39, %v237
    %242 = vset.pattern.permute.xlu0 7
    %243 = vperm.xlu0 %242, %v238
    %v244 = vpop.permute.xlu0 %243
    %245 = vset.pattern.permute.xlu0 7
    %246 = vperm.xlu0 %245, %v239
    %v247 = vpop.permute.xlu0 %246
    %248 = vset.pattern.permute.xlu0 7
    %249 = vperm.xlu0 %248, %v240
    %v250 = vpop.permute.xlu0 %249
    %251 = vset.pattern.permute.xlu0 7
    %252 = vperm.xlu0 %251, %v241
    %v253 = vpop.permute.xlu0 %252
    %vm254 = vcmp.eq.s32.totalorder %v244, %v57
    %vm255 = vcmp.eq.s32.totalorder %v247, %v57
    %vm256 = vcmp.eq.s32.totalorder %v250, %v57
    %vm257 = vcmp.eq.s32.totalorder %v253, %v57
    %vm258 = vmor %vm232, %vm254
    %vm259 = vmor %vm233, %vm255
    %vm260 = vmor %vm234, %vm256
    %vm261 = vmor %vm235, %vm257
    %v262 = vsel %vm258, 1, 0
    %v263 = vsel %vm259, 1, 0
    %v264 = vsel %vm260, 1, 0
    %v265 = vsel %vm261, 1, 0
    %v266 = vcvt.s32.f32 %v262
    %v267 = vcvt.s32.f32 %v263
    %v268 = vcvt.s32.f32 %v264
    %v269 = vcvt.s32.f32 %v265
    %v270 = vpack.c.bf16 %v267, %v266
    %v271 = vpack.c.bf16 %v269, %v268
    %v288 = vunpack.c.l.b16 %v40
    %v289 = vunpack.c.l.b16 %v41
    %v290 = vunpack.c.l.b16 %v42
    %v291 = vunpack.c.l.b16 %v43
    %v292 = vunpack.c.l.b16 %v44
    %v293 = vunpack.c.l.b16 %v45
    %v294 = vunpack.c.l.b16 %v46
    %v295 = vunpack.c.l.b16 %v47
    %v296 = vunpack.c.l.b16 %v48
    %v297 = vunpack.c.l.b16 %v49
    %v298 = vunpack.c.l.b16 %v50
    %v299 = vunpack.c.l.b16 %v51
    %v300 = vunpack.c.l.b16 %v52
    %v301 = vunpack.c.l.b16 %v53
    %v302 = vunpack.c.l.b16 %v54
    %v303 = vunpack.c.l.b16 %v55
    %v304 = vpack.c.b16 %v289, %v288
    %v305 = vpack.c.b16 %v291, %v290
    %v306 = vpack.c.b16 %v293, %v292
    %v307 = vpack.c.b16 %v295, %v294
    %v308 = vpack.c.b16 %v297, %v296
    %v309 = vpack.c.b16 %v299, %v298
    %v310 = vpack.c.b16 %v301, %v300
    %v311 = vpack.c.b16 %v303, %v302
    %320 = vmatpush.bf16.msra.mxu0 %v311
    %321 = vmatpush.bf16.msra.mxu0 %v310
    %322 = vmatpush.bf16.msra.mxu0 %v309
    %323 = vmatpush.bf16.msra.mxu0 %v308
    %324 = vmatpush.bf16.msra.mxu0 %v307
    %325 = vmatpush.bf16.msra.mxu0 %v306
    %326 = vmatpush.bf16.msra.mxu0 %v305
    %327 = vmatpush.bf16.msra.mxu0 %v304
    %328 = vmatmul.bf16.gmra.mxu0 %v270
    %v329 = vpop.f32.mrf.mxu0
    %v330 = vadd.f32 0.0, %v329
    %v331 = vpop.f32.mrf.mxu0
    %v332 = vadd.f32 0.0, %v331
    %333 = vmatmul.bf16.gmra.mxu0 %v271
    %v334 = vpop.f32.mrf.mxu0
    %v335 = vadd.f32 0.0, %v334
    %v336 = vpop.f32.mrf.mxu0
    %v337 = vadd.f32 0.0, %v336
    %338 = vdwg.mxu0
    %v339 = vpack.c.bf16 %v330, %v330
    %v340 = vpack.c.bf16 %v332, %v332
    %v341 = vpack.c.bf16 %v335, %v335
    %v342 = vpack.c.bf16 %v337, %v337
    %343 = vst [vmem:[%s3] sm:$0xf] %v339
    %344 = vst [vmem:[%s3 + $0x4] sm:$0xf] %v340
    %345 = vst [vmem:[%s3 + $0x8] sm:$0xf] %v341
    %346 = vst [vmem:[%s3 + $0xc] sm:$0xf] %v342
    // Predicated region
    $region14: #{basic_cat_embedding.1} parent=1 // pred_check
      _
    $region15: #{basic_cat_embedding.1} parent=1 // pred_check_branch
      %348 = sbr.rel (0) target = $region17
    $region16: #{basic_cat_embedding.1} parent=1 // pred_region
      _
    $region17: #{basic_cat_embedding.1} parent=1 // pred_fallthru
      _
    // Predicated region
    $region18: #{basic_cat_embedding.1} parent=1 // pred_check
      _
    $region19: #{basic_cat_embedding.1} parent=1 // pred_check_branch
      %350 = sbr.rel (0) target = $region21
    $region20: #{basic_cat_embedding.1} parent=1 // pred_region
      _
    $region21: #{basic_cat_embedding.1} parent=1 // pred_fallthru
      _
    %351 = vsyncpa [#allocation5], 1

</llo_original>
